<compile_context>
chip_gen: v7x
topology: tpu7x:2x2x1
jax: 0.10.0
libtpu: 0.0.40
codegen_flags: <defaults>
</compile_context>

<pallas_src>
import functools

import jax
import jax.numpy as jnp
from jax import lax
from jax.experimental import pallas as pl
from jax.experimental.pallas import tpu as pltpu


def _fused_double_conv_kernel(H, WCi, WCo, NB,
                              x_ref, w1_ref, w2_ref,
                              s1_ref, b1_ref, s2_ref, b2_ref,
                              out_ref, xpad, ypad):
    """Fused (conv3x3 -> BN -> ReLU) x 2 for NB images in one grid step.

    x_ref  : (NB, H, WCi)        lane-dense input images (WCi = W*Cin)
    w1_ref : (3, WCi, WCo)       banded conv1 weights, one slab per dy
    w2_ref : (3, WCo, WCo)       banded conv2 weights
    s*/b*  : (1, WCo)            folded BN scale / shift (tiled over W)
    out_ref: (NB, H, WCo)        lane-dense output images (WCo = W*Cout)
    xpad   : VMEM (NB, H+2, WCi)  row-padded input              (scratch)
    ypad   : VMEM (NB, H+2, WCo)  row-padded conv1 activation   (scratch)
    """
    # Zero only the two height-padding rows of each image (the interior is
    # fully overwritten below).  Done every grid step, so the kernel remains
    # correct under any megacore split of the (parallel) batch axis.
    xpad[:, 0:1, :] = jnp.zeros((NB, 1, WCi), xpad.dtype)
    xpad[:, H + 1:H + 2, :] = jnp.zeros((NB, 1, WCi), xpad.dtype)
    ypad[:, 0:1, :] = jnp.zeros((NB, 1, WCo), ypad.dtype)
    ypad[:, H + 1:H + 2, :] = jnp.zeros((NB, 1, WCo), ypad.dtype)

    # ---- Stage 1: conv1 + BN + ReLU (3 fat MXU matmuls, K = W*Cin) --------
    xpad[:, 1:H + 1, :] = x_ref[...]
    acc1 = jnp.zeros((NB * H, WCo), jnp.float32)
    for dy in range(3):
        lhs = xpad[:, dy:dy + H, :].reshape(NB * H, WCi)
        acc1 += jnp.dot(lhs, w1_ref[dy], preferred_element_type=jnp.float32)
    y1 = jnp.maximum(acc1 * s1_ref[...] + b1_ref[...], 0.0)
    ypad[:, 1:H + 1, :] = y1.reshape(NB, H, WCo)

    # ---- Stage 2: conv2 + BN + ReLU (3 fat MXU matmuls, K = W*Cout) -------
    acc2 = jnp.zeros((NB * H, WCo), jnp.float32)
    for dy in range(3):
        lhs = ypad[:, dy:dy + H, :].reshape(NB * H, WCo)
        acc2 += jnp.dot(lhs, w2_ref[dy], preferred_element_type=jnp.float32)
    y2 = jnp.maximum(acc2 * s2_ref[...] + b2_ref[...], 0.0)
    out_ref[...] = y2.reshape(NB, H, WCo).astype(out_ref.dtype)


def _band_weights(w_oihw, W):
    """PyTorch conv weight (Cout, Cin, 3, 3) -> banded (3, W*Cin, W*Cout).

    band[dy][wi*Cin + ci, w*Cout + co] = w[co, ci, dy, wi - w + 1] when
    wi - w + 1 in {0, 1, 2}, else 0.  Then (image_row @ band[dy]) computes the
    (dx, ci) part of the 3x3 conv for a whole row in one MXU matmul; width
    zero-padding falls out for free because the out-of-range taps are simply
    absent from the band (no pad columns -> K is exactly W*Cin).
    Built once in the wrapper (tiny).
    """
    Cout, Cin = w_oihw.shape[0], w_oihw.shape[1]
    w_t = jnp.transpose(w_oihw, (2, 3, 1, 0)).astype(jnp.float32)  # (dy, dx, ci, co)
    bands = []
    for dy in range(3):
        m = jnp.zeros((W * Cin, W * Cout), jnp.float32)
        for dx in range(3):
            # input column wi contributes to output column w = wi + 1 - dx
            sel = jnp.eye(W, W, k=1 - dx, dtype=jnp.float32)
            m = m + jnp.kron(sel, w_t[dy, dx])
        bands.append(m)
    return jnp.stack(bands)


def _fold_bn(conv_b, gamma, beta, running_mean, running_var, eps=1e-5):
    """Fold conv bias + BatchNorm(eval, running stats) into per-channel scale/shift."""
    # TODO(synk): training-mode BatchNorm (batch statistics) is not implemented;
    # eval-mode running statistics are folded into the conv epilogue.
    scale = gamma / jnp.sqrt(running_var + eps)
    shift = (conv_b - running_mean) * scale + beta
    return scale.astype(jnp.float32), shift.astype(jnp.float32)


def _images_per_step(N, H):
    """Stack images into the matmul M dimension (M ~ nb*H), but keep >= 2 grid
    steps whenever N >= 2 so v7x's two TensorCores both receive work."""
    cap = max(1, 128 // (H + 2))
    if N >= 2:
        cap = min(cap, N // 2)
    nb = 1
    for d in range(1, N + 1):
        if N % d == 0 and d <= cap:
            nb = d
    return nb


@jax.jit
def double_conv_forward_lane_dense(x, params):
    """Primary interface: x (N, H, W*Cin) float32 -> (N, H, W*Cout) float32."""
    N, H, WCi = x.shape
    WCo = params["s1"].shape[-1]
    NB = _images_per_step(N, H)          # images stacked per grid step
    grid = (N // NB,)

    flops = 6 * N * H * WCo * (WCi + WCo)
    bytes_accessed = 4 * (x.size + N * H * WCo
                          + params["w1b"].size + params["w2b"].size + 4 * WCo)

    return pl.pallas_call(
        functools.partial(_fused_double_conv_kernel, H, WCi, WCo, NB),
        out_shape=jax.ShapeDtypeStruct((N, H, WCo), jnp.float32),
        grid_spec=pltpu.PrefetchScalarGridSpec(
            num_scalar_prefetch=0,
            grid=grid,
            in_specs=[
                pl.BlockSpec((NB, H, WCi), lambda n: (n, 0, 0)),
                pl.BlockSpec((3, WCi, WCo), lambda n: (0, 0, 0)),
                pl.BlockSpec((3, WCo, WCo), lambda n: (0, 0, 0)),
                pl.BlockSpec((1, WCo), lambda n: (0, 0)),
                pl.BlockSpec((1, WCo), lambda n: (0, 0)),
                pl.BlockSpec((1, WCo), lambda n: (0, 0)),
                pl.BlockSpec((1, WCo), lambda n: (0, 0)),
            ],
            out_specs=pl.BlockSpec((NB, H, WCo), lambda n: (n, 0, 0)),
            scratch_shapes=[
                pltpu.VMEM((NB, H + 2, WCi), jnp.float32),   # row-padded input
                pltpu.VMEM((NB, H + 2, WCo), jnp.float32),   # row-padded conv1 act
            ],
        ),
        compiler_params=pltpu.CompilerParams(
            dimension_semantics=("parallel",),
            vmem_limit_bytes=32 * 1024 * 1024,
        ),
        cost_estimate=pl.CostEstimate(flops=flops, transcendentals=0,
                                      bytes_accessed=bytes_accessed),
    )(x, params["w1b"], params["w2b"],
      params["s1"], params["b1"], params["s2"], params["b2"])


@jax.jit
def double_conv_forward(x_nchw, params):
    """PyTorch-layout adapter: x (N, Cin, H, W) -> (N, Cout, H, W), float32.

    NOTE: the two transposes below are full-activation HBM round trips handled
    by XLA outside the kernel; prefer calling double_conv_forward_lane_dense
    with (N, H, W*C) data directly when the surrounding model allows it.
    """
    N, Cin, H, W = x_nchw.shape
    Cout = params["s1"].shape[-1] // W
    x = jnp.transpose(x_nchw, (0, 2, 3, 1)).reshape(N, H, W * Cin)
    out = double_conv_forward_lane_dense(x, params)
    return jnp.transpose(out.reshape(N, H, W, Cout), (0, 3, 1, 2))


def init_params(key, in_ch, out_ch, W):
    """Deterministic synthetic double_conv(in_ch, out_ch) parameters, returned
    both in kernel-ready layout (banded weights, tiled folded BN) and raw
    (PyTorch layout) form for the reference check."""
    ks = jax.random.split(key, 8)
    w1 = 0.1 * jax.random.normal(ks[0], (out_ch, in_ch, 3, 3), jnp.float32)
    b1 = 0.05 * jax.random.normal(ks[1], (out_ch,), jnp.float32)
    w2 = 0.1 * jax.random.normal(ks[2], (out_ch, out_ch, 3, 3), jnp.float32)
    b2 = 0.05 * jax.random.normal(ks[3], (out_ch,), jnp.float32)
    g1 = 1.0 + 0.1 * jax.random.normal(ks[4], (out_ch,), jnp.float32)
    be1 = 0.1 * jax.random.normal(ks[5], (out_ch,), jnp.float32)
    g2 = 1.0 + 0.1 * jax.random.normal(ks[6], (out_ch,), jnp.float32)
    be2 = 0.1 * jax.random.normal(ks[7], (out_ch,), jnp.float32)
    m1 = 0.01 * jnp.arange(out_ch, dtype=jnp.float32)
    v1 = 1.0 + 0.02 * jnp.arange(out_ch, dtype=jnp.float32)
    m2 = 0.02 * jnp.arange(out_ch, dtype=jnp.float32)
    v2 = 1.0 + 0.03 * jnp.arange(out_ch, dtype=jnp.float32)

    raw = dict(w1=w1, b1=b1, g1=g1, be1=be1, m1=m1, v1=v1,
               w2=w2, b2=b2, g2=g2, be2=be2, m2=m2, v2=v2)

    s1, sh1 = _fold_bn(b1, g1, be1, m1, v1)
    s2, sh2 = _fold_bn(b2, g2, be2, m2, v2)
    params = {
        "w1b": _band_weights(w1, W),
        "w2b": _band_weights(w2, W),
        "s1": jnp.tile(s1, W)[None, :],
        "b1": jnp.tile(sh1, W)[None, :],
        "s2": jnp.tile(s2, W)[None, :],
        "b2": jnp.tile(sh2, W)[None, :],
    }
    return params, raw


def _reference_double_conv(x, raw, eps=1e-5):
    """Pure-JAX reference matching the PyTorch module (eval-mode BatchNorm)."""
    def conv_bn_relu(x, w, b, g, beta, m, v):
        y = lax.conv_general_dilated(x, w, (1, 1), ((1, 1), (1, 1)),
                                     dimension_numbers=("NCHW", "OIHW", "NCHW"))
        y = y + b[None, :, None, None]
        y = (y - m[None, :, None, None]) / jnp.sqrt(v[None, :, None, None] + eps)
        y = y * g[None, :, None, None] + beta[None, :, None, None]
        return jnp.maximum(y, 0.0)

    y = conv_bn_relu(x, raw["w1"], raw["b1"], raw["g1"], raw["be1"], raw["m1"], raw["v1"])
    return conv_bn_relu(y, raw["w2"], raw["b2"], raw["g2"], raw["be2"], raw["m2"], raw["v2"])


if __name__ == "__main__":
    key = jax.random.PRNGKey(0)
    k_x, k_p, k_x2 = jax.random.split(key, 3)

    N, C_IN, C_OUT, H, W = 2, 4, 8, 16, 16
    params, raw = init_params(k_p, C_IN, C_OUT, W)

    # Case 1: N=2 -> one image per grid step (two "parallel" steps).
    x = jax.random.normal(k_x, (N, C_IN, H, W), jnp.float32)
    out = jax.block_until_ready(double_conv_forward(x, params))
    assert out.shape == (N, C_OUT, H, W), out.shape
    assert out.dtype == jnp.float32
    ref = jax.block_until_ready(_reference_double_conv(x, raw))
    err = float(jnp.max(jnp.abs(out - ref)))
    assert jnp.allclose(out, ref, atol=1e-4, rtol=1e-4), err

    # Case 2: N=4 -> two images stacked into the matmul M dimension per step.
    x2 = jax.random.normal(k_x2, (4, C_IN, H, W), jnp.float32)
    out2 = jax.block_until_ready(double_conv_forward(x2, params))
    assert out2.shape == (4, C_OUT, H, W), out2.shape
    ref2 = jax.block_until_ready(_reference_double_conv(x2, raw))
    err2 = float(jnp.max(jnp.abs(out2 - ref2)))
    assert jnp.allclose(out2, ref2, atol=1e-4, rtol=1e-4), err2

    print("KERNEL_OK")
</pallas_src>

<mosaic_0001>
module attributes {stable_mosaic.version = 11 : i64} {
  func.func @_fused_double_conv_kernel(%arg0: i32, %arg1: memref<1x16x64xf32, #tpu.memory_space<vmem>>, %arg2: memref<3x64x128xf32, #tpu.memory_space<vmem>>, %arg3: memref<3x128x128xf32, #tpu.memory_space<vmem>>, %arg4: memref<1x128xf32, #tpu.memory_space<vmem>>, %arg5: memref<1x128xf32, #tpu.memory_space<vmem>>, %arg6: memref<1x128xf32, #tpu.memory_space<vmem>>, %arg7: memref<1x128xf32, #tpu.memory_space<vmem>>, %arg8: memref<1x16x128xf32, #tpu.memory_space<vmem>>, %arg9: memref<1x18x64xf32, #tpu.memory_space<vmem>>, %arg10: memref<1x18x128xf32, #tpu.memory_space<vmem>>) attributes {dimension_semantics = [#tpu.dimension_semantics<parallel>], iteration_bounds = array<i64: 2>, scalar_prefetch = 0 : i64, scratch_operands = 2 : i64, tpu.core_type = #tpu.core_type<tc>, window_params = [{transform_indices = @transform_0, window_bounds = array<i64: 1, 16, 64>}, {pipeline_mode = #tpu.pipeline_mode<synchronous>, transform_indices = @transform_1, window_bounds = array<i64: 3, 64, 128>}, {pipeline_mode = #tpu.pipeline_mode<synchronous>, transform_indices = @transform_2, window_bounds = array<i64: 3, 128, 128>}, {pipeline_mode = #tpu.pipeline_mode<synchronous>, transform_indices = @transform_3, window_bounds = array<i64: 1, 128>}, {pipeline_mode = #tpu.pipeline_mode<synchronous>, transform_indices = @transform_4, window_bounds = array<i64: 1, 128>}, {pipeline_mode = #tpu.pipeline_mode<synchronous>, transform_indices = @transform_5, window_bounds = array<i64: 1, 128>}, {pipeline_mode = #tpu.pipeline_mode<synchronous>, transform_indices = @transform_6, window_bounds = array<i64: 1, 128>}, {transform_indices = @transform_7, window_bounds = array<i64: 1, 16, 128>}]} {
    %cst = arith.constant 0.000000e+00 : f32
    %0 = vector.broadcast %cst : f32 to vector<1x1x64xf32>
    %c0 = arith.constant 0 : index
    %c0_0 = arith.constant 0 : index
    %c0_1 = arith.constant 0 : index
    %1 = vector.load %arg9[%c0, %c0_0, %c0_1] : memref<1x18x64xf32, #tpu.memory_space<vmem>>, vector<1x1x64xf32>
    tpu.vector_store %arg9[%c0, %c0_0, %c0_1], %0 {strides = array<i32>} : memref<1x18x64xf32, #tpu.memory_space<vmem>>, vector<1x1x64xf32>,
    %cst_2 = arith.constant 0.000000e+00 : f32
    %2 = vector.broadcast %cst_2 : f32 to vector<1x1x64xf32>
    %c0_3 = arith.constant 0 : index
    %c17 = arith.constant 17 : index
    %c0_4 = arith.constant 0 : index
    %3 = vector.load %arg9[%c0_3, %c17, %c0_4] : memref<1x18x64xf32, #tpu.memory_space<vmem>>, vector<1x1x64xf32>
    tpu.vector_store %arg9[%c0_3, %c17, %c0_4], %2 {strides = array<i32>} : memref<1x18x64xf32, #tpu.memory_space<vmem>>, vector<1x1x64xf32>,
    %cst_5 = arith.constant 0.000000e+00 : f32
    %4 = vector.broadcast %cst_5 : f32 to vector<1x1x128xf32>
    %c0_6 = arith.constant 0 : index
    %c0_7 = arith.constant 0 : index
    %c0_8 = arith.constant 0 : index
    %5 = vector.load %arg10[%c0_6, %c0_7, %c0_8] : memref<1x18x128xf32, #tpu.memory_space<vmem>>, vector<1x1x128xf32>
    tpu.vector_store %arg10[%c0_6, %c0_7, %c0_8], %4 {strides = array<i32>} : memref<1x18x128xf32, #tpu.memory_space<vmem>>, vector<1x1x128xf32>,
    %cst_9 = arith.constant 0.000000e+00 : f32
    %6 = vector.broadcast %cst_9 : f32 to vector<1x1x128xf32>
    %c0_10 = arith.constant 0 : index
    %c17_11 = arith.constant 17 : index
    %c0_12 = arith.constant 0 : index
    %7 = vector.load %arg10[%c0_10, %c17_11, %c0_12] : memref<1x18x128xf32, #tpu.memory_space<vmem>>, vector<1x1x128xf32>
    tpu.vector_store %arg10[%c0_10, %c17_11, %c0_12], %6 {strides = array<i32>} : memref<1x18x128xf32, #tpu.memory_space<vmem>>, vector<1x1x128xf32>,
    %c0_13 = arith.constant 0 : index
    %c0_14 = arith.constant 0 : index
    %c0_15 = arith.constant 0 : index
    %8 = vector.load %arg1[%c0_13, %c0_14, %c0_15] : memref<1x16x64xf32, #tpu.memory_space<vmem>>, vector<1x16x64xf32>
    %c0_16 = arith.constant 0 : index
    %c1 = arith.constant 1 : index
    %c0_17 = arith.constant 0 : index
    %9 = vector.load %arg9[%c0_16, %c1, %c0_17] : memref<1x18x64xf32, #tpu.memory_space<vmem>>, vector<1x16x64xf32>
    tpu.vector_store %arg9[%c0_16, %c1, %c0_17], %8 {strides = array<i32>} : memref<1x18x64xf32, #tpu.memory_space<vmem>>, vector<1x16x64xf32>,
    %cst_18 = arith.constant 0.000000e+00 : f32
    %10 = vector.broadcast %cst_18 : f32 to vector<16x128xf32>
    %c0_19 = arith.constant 0 : index
    %c0_20 = arith.constant 0 : index
    %c0_21 = arith.constant 0 : index
    %11 = vector.load %arg9[%c0_19, %c0_20, %c0_21] : memref<1x18x64xf32, #tpu.memory_space<vmem>>, vector<1x16x64xf32>
    %12 = vector.shape_cast %11 : vector<1x16x64xf32> to vector<16x64xf32>
    %c0_22 = arith.constant 0 : index
    %c0_23 = arith.constant 0 : index
    %c0_24 = arith.constant 0 : index
    %13 = vector.load %arg2[%c0_22, %c0_23, %c0_24] : memref<3x64x128xf32, #tpu.memory_space<vmem>>, vector<1x64x128xf32>
    %14 = vector.shape_cast %13 : vector<1x64x128xf32> to vector<64x128xf32>
    %cst_25 = arith.constant dense<0.000000e+00> : vector<16x128xf32>
    %15 = tpu.matmul %12, %14, %cst_25 {dimension_numbers = #tpu.dot_dimension_numbers<[1], [0], [0], [1], [0, 0, 1, 1], [], []>} : vector<16x64xf32>, vector<64x128xf32>, vector<16x128xf32> -> vector<16x128xf32>
    %16 = arith.addf %10, %15 : vector<16x128xf32>
    %c0_26 = arith.constant 0 : index
    %c1_27 = arith.constant 1 : index
    %c0_28 = arith.constant 0 : index
    %17 = vector.load %arg9[%c0_26, %c1_27, %c0_28] : memref<1x18x64xf32, #tpu.memory_space<vmem>>, vector<1x16x64xf32>
    %18 = vector.shape_cast %17 : vector<1x16x64xf32> to vector<16x64xf32>
    %c1_29 = arith.constant 1 : index
    %c0_30 = arith.constant 0 : index
    %c0_31 = arith.constant 0 : index
    %19 = vector.load %arg2[%c1_29, %c0_30, %c0_31] : memref<3x64x128xf32, #tpu.memory_space<vmem>>, vector<1x64x128xf32>
    %20 = vector.shape_cast %19 : vector<1x64x128xf32> to vector<64x128xf32>
    %cst_32 = arith.constant dense<0.000000e+00> : vector<16x128xf32>
    %21 = tpu.matmul %18, %20, %cst_32 {dimension_numbers = #tpu.dot_dimension_numbers<[1], [0], [0], [1], [0, 0, 1, 1], [], []>} : vector<16x64xf32>, vector<64x128xf32>, vector<16x128xf32> -> vector<16x128xf32>
    %22 = arith.addf %16, %21 : vector<16x128xf32>
    %c0_33 = arith.constant 0 : index
    %c2 = arith.constant 2 : index
    %c0_34 = arith.constant 0 : index
    %23 = vector.load %arg9[%c0_33, %c2, %c0_34] : memref<1x18x64xf32, #tpu.memory_space<vmem>>, vector<1x16x64xf32>
    %24 = vector.shape_cast %23 : vector<1x16x64xf32> to vector<16x64xf32>
    %c2_35 = arith.constant 2 : index
    %c0_36 = arith.constant 0 : index
    %c0_37 = arith.constant 0 : index
    %25 = vector.load %arg2[%c2_35, %c0_36, %c0_37] : memref<3x64x128xf32, #tpu.memory_space<vmem>>, vector<1x64x128xf32>
    %26 = vector.shape_cast %25 : vector<1x64x128xf32> to vector<64x128xf32>
    %cst_38 = arith.constant dense<0.000000e+00> : vector<16x128xf32>
    %27 = tpu.matmul %24, %26, %cst_38 {dimension_numbers = #tpu.dot_dimension_numbers<[1], [0], [0], [1], [0, 0, 1, 1], [], []>} : vector<16x64xf32>, vector<64x128xf32>, vector<16x128xf32> -> vector<16x128xf32>
    %28 = arith.addf %22, %27 : vector<16x128xf32>
    %c0_39 = arith.constant 0 : index
    %c0_40 = arith.constant 0 : index
    %29 = vector.load %arg4[%c0_39, %c0_40] : memref<1x128xf32, #tpu.memory_space<vmem>>, vector<1x128xf32>
    %30 = vector.broadcast %29 : vector<1x128xf32> to vector<16x128xf32>
    %31 = arith.mulf %28, %30 : vector<16x128xf32>
    %c0_41 = arith.constant 0 : index
    %c0_42 = arith.constant 0 : index
    %32 = vector.load %arg5[%c0_41, %c0_42] : memref<1x128xf32, #tpu.memory_space<vmem>>, vector<1x128xf32>
    %33 = vector.broadcast %32 : vector<1x128xf32> to vector<16x128xf32>
    %34 = arith.addf %31, %33 : vector<16x128xf32>
    %cst_43 = arith.constant 0.000000e+00 : f32
    %35 = vector.broadcast %cst_43 : f32 to vector<16x128xf32>
    %36 = arith.maximumf %34, %35 : vector<16x128xf32>
    %37 = vector.shape_cast %36 : vector<16x128xf32> to vector<1x16x128xf32>
    %c0_44 = arith.constant 0 : index
    %c1_45 = arith.constant 1 : index
    %c0_46 = arith.constant 0 : index
    %38 = vector.load %arg10[%c0_44, %c1_45, %c0_46] : memref<1x18x128xf32, #tpu.memory_space<vmem>>, vector<1x16x128xf32>
    tpu.vector_store %arg10[%c0_44, %c1_45, %c0_46], %37 {strides = array<i32>} : memref<1x18x128xf32, #tpu.memory_space<vmem>>, vector<1x16x128xf32>,
    %cst_47 = arith.constant 0.000000e+00 : f32
    %39 = vector.broadcast %cst_47 : f32 to vector<16x128xf32>
    %c0_48 = arith.constant 0 : index
    %c0_49 = arith.constant 0 : index
    %c0_50 = arith.constant 0 : index
    %40 = vector.load %arg10[%c0_48, %c0_49, %c0_50] : memref<1x18x128xf32, #tpu.memory_space<vmem>>, vector<1x16x128xf32>
    %41 = vector.shape_cast %40 : vector<1x16x128xf32> to vector<16x128xf32>
    %c0_51 = arith.constant 0 : index
    %c0_52 = arith.constant 0 : index
    %c0_53 = arith.constant 0 : index
    %42 = vector.load %arg3[%c0_51, %c0_52, %c0_53] : memref<3x128x128xf32, #tpu.memory_space<vmem>>, vector<1x128x128xf32>
    %43 = vector.shape_cast %42 : vector<1x128x128xf32> to vector<128x128xf32>
    %cst_54 = arith.constant dense<0.000000e+00> : vector<16x128xf32>
    %44 = tpu.matmul %41, %43, %cst_54 {dimension_numbers = #tpu.dot_dimension_numbers<[1], [0], [0], [1], [0, 0, 1, 1], [], []>} : vector<16x128xf32>, vector<128x128xf32>, vector<16x128xf32> -> vector<16x128xf32>
    %45 = arith.addf %39, %44 : vector<16x128xf32>
    %c0_55 = arith.constant 0 : index
    %c1_56 = arith.constant 1 : index
    %c0_57 = arith.constant 0 : index
    %46 = vector.load %arg10[%c0_55, %c1_56, %c0_57] : memref<1x18x128xf32, #tpu.memory_space<vmem>>, vector<1x16x128xf32>
    %47 = vector.shape_cast %46 : vector<1x16x128xf32> to vector<16x128xf32>
    %c1_58 = arith.constant 1 : index
    %c0_59 = arith.constant 0 : index
    %c0_60 = arith.constant 0 : index
    %48 = vector.load %arg3[%c1_58, %c0_59, %c0_60] : memref<3x128x128xf32, #tpu.memory_space<vmem>>, vector<1x128x128xf32>
    %49 = vector.shape_cast %48 : vector<1x128x128xf32> to vector<128x128xf32>
    %cst_61 = arith.constant dense<0.000000e+00> : vector<16x128xf32>
    %50 = tpu.matmul %47, %49, %cst_61 {dimension_numbers = #tpu.dot_dimension_numbers<[1], [0], [0], [1], [0, 0, 1, 1], [], []>} : vector<16x128xf32>, vector<128x128xf32>, vector<16x128xf32> -> vector<16x128xf32>
    %51 = arith.addf %45, %50 : vector<16x128xf32>
    %c0_62 = arith.constant 0 : index
    %c2_63 = arith.constant 2 : index
    %c0_64 = arith.constant 0 : index
    %52 = vector.load %arg10[%c0_62, %c2_63, %c0_64] : memref<1x18x128xf32, #tpu.memory_space<vmem>>, vector<1x16x128xf32>
    %53 = vector.shape_cast %52 : vector<1x16x128xf32> to vector<16x128xf32>
    %c2_65 = arith.constant 2 : index
    %c0_66 = arith.constant 0 : index
    %c0_67 = arith.constant 0 : index
    %54 = vector.load %arg3[%c2_65, %c0_66, %c0_67] : memref<3x128x128xf32, #tpu.memory_space<vmem>>, vector<1x128x128xf32>
    %55 = vector.shape_cast %54 : vector<1x128x128xf32> to vector<128x128xf32>
    %cst_68 = arith.constant dense<0.000000e+00> : vector<16x128xf32>
    %56 = tpu.matmul %53, %55, %cst_68 {dimension_numbers = #tpu.dot_dimension_numbers<[1], [0], [0], [1], [0, 0, 1, 1], [], []>} : vector<16x128xf32>, vector<128x128xf32>, vector<16x128xf32> -> vector<16x128xf32>
    %57 = arith.addf %51, %56 : vector<16x128xf32>
    %c0_69 = arith.constant 0 : index
    %c0_70 = arith.constant 0 : index
    %58 = vector.load %arg6[%c0_69, %c0_70] : memref<1x128xf32, #tpu.memory_space<vmem>>, vector<1x128xf32>
    %59 = vector.broadcast %58 : vector<1x128xf32> to vector<16x128xf32>
    %60 = arith.mulf %57, %59 : vector<16x128xf32>
    %c0_71 = arith.constant 0 : index
    %c0_72 = arith.constant 0 : index
    %61 = vector.load %arg7[%c0_71, %c0_72] : memref<1x128xf32, #tpu.memory_space<vmem>>, vector<1x128xf32>
    %62 = vector.broadcast %61 : vector<1x128xf32> to vector<16x128xf32>
    %63 = arith.addf %60, %62 : vector<16x128xf32>
    %cst_73 = arith.constant 0.000000e+00 : f32
    %64 = vector.broadcast %cst_73 : f32 to vector<16x128xf32>
    %65 = arith.maximumf %63, %64 : vector<16x128xf32>
    %66 = vector.shape_cast %65 : vector<16x128xf32> to vector<1x16x128xf32>
    %c0_74 = arith.constant 0 : index
    %c0_75 = arith.constant 0 : index
    %c0_76 = arith.constant 0 : index
    %67 = vector.load %arg8[%c0_74, %c0_75, %c0_76] : memref<1x16x128xf32, #tpu.memory_space<vmem>>, vector<1x16x128xf32>
    tpu.vector_store %arg8[%c0_74, %c0_75, %c0_76], %66 {strides = array<i32>} : memref<1x16x128xf32, #tpu.memory_space<vmem>>, vector<1x16x128xf32>,
    return
  }
  func.func @transform_0(%arg0: i32) -> (i32, i32, i32) {
    %c0_i32 = arith.constant 0 : i32
    %c0_i32_0 = arith.constant 0 : i32
    %c0_i32_1 = arith.constant 0 : i32
    return %arg0, %c0_i32, %c0_i32_0 : i32, i32, i32
  }
  func.func @transform_1(%arg0: i32) -> (i32, i32, i32) {
    %c0_i32 = arith.constant 0 : i32
    %c0_i32_0 = arith.constant 0 : i32
    %c0_i32_1 = arith.constant 0 : i32
    %c0_i32_2 = arith.constant 0 : i32
    return %c0_i32, %c0_i32_0, %c0_i32_1 : i32, i32, i32
  }
  func.func @transform_2(%arg0: i32) -> (i32, i32, i32) {
    %c0_i32 = arith.constant 0 : i32
    %c0_i32_0 = arith.constant 0 : i32
    %c0_i32_1 = arith.constant 0 : i32
    %c0_i32_2 = arith.constant 0 : i32
    return %c0_i32, %c0_i32_0, %c0_i32_1 : i32, i32, i32
  }
  func.func @transform_3(%arg0: i32) -> (i32, i32) {
    %c0_i32 = arith.constant 0 : i32
    %c0_i32_0 = arith.constant 0 : i32
    %c0_i32_1 = arith.constant 0 : i32
    return %c0_i32, %c0_i32_0 : i32, i32
  }
  func.func @transform_4(%arg0: i32) -> (i32, i32) {
    %c0_i32 = arith.constant 0 : i32
    %c0_i32_0 = arith.constant 0 : i32
    %c0_i32_1 = arith.constant 0 : i32
    return %c0_i32, %c0_i32_0 : i32, i32
  }
  func.func @transform_5(%arg0: i32) -> (i32, i32) {
    %c0_i32 = arith.constant 0 : i32
    %c0_i32_0 = arith.constant 0 : i32
    %c0_i32_1 = arith.constant 0 : i32
    return %c0_i32, %c0_i32_0 : i32, i32
  }
  func.func @transform_6(%arg0: i32) -> (i32, i32) {
    %c0_i32 = arith.constant 0 : i32
    %c0_i32_0 = arith.constant 0 : i32
    %c0_i32_1 = arith.constant 0 : i32
    return %c0_i32, %c0_i32_0 : i32, i32
  }
  func.func @transform_7(%arg0: i32) -> (i32, i32, i32) {
    %c0_i32 = arith.constant 0 : i32
    %c0_i32_0 = arith.constant 0 : i32
    %c0_i32_1 = arith.constant 0 : i32
    return %arg0, %c0_i32, %c0_i32_0 : i32, i32, i32
  }
}

</mosaic_0001>

<llo_original>
// kernel: double_conv_forward_lane_dense.1
$region0: #{double_conv_forward_lane_dense.1}
  #allocation0 [shape = 'u32[]', space=smem, size = 0x4, offset = 0x4, fixed_abs, tag = 'smem constant byte address 0x4 - core index']
  #allocation1 [shape = 'u32[144,128]{1,0:T(1,128)}', space=vmem, size = 0x12000, scoped, tag = 'internal scratch']
  #allocation2 [shape = 'f32[1,18,64]{2,1,0:T(8,128)}', space=vmem, size = 0x3000, scoped, tag = 'scratch operand']
  #allocation3 [shape = 'f32[1,18,128]{2,1,0:T(8,128)}', space=vmem, size = 0x3000, scoped, tag = 'scratch operand']
  %s0 = inlined_call_operand.hbm [shape: f32[2,16,64], index: 0, kind: input, shape index: {}]
  %s1 = inlined_call_operand.hbm [shape: f32[3,64,128], index: 1, kind: input, shape index: {}]
  %s2 = inlined_call_operand.hbm [shape: f32[3,128,128], index: 2, kind: input, shape index: {}]
  %s3 = inlined_call_operand.vmem [shape: f32[1,128], index: 3, kind: input, shape index: {}]
  %s4 = inlined_call_operand.vmem [shape: f32[1,128], index: 4, kind: input, shape index: {}]
  %s5 = inlined_call_operand.vmem [shape: f32[1,128], index: 5, kind: input, shape index: {}]
  %s6 = inlined_call_operand.vmem [shape: f32[1,128], index: 6, kind: input, shape index: {}]
  %s7 = inlined_call_operand.hbm [shape: f32[2,16,128], index: 7, kind: output, shape index: {}]
  %s8 = sld [smem:[#allocation0]]
  $region73: #{double_conv_forward_lane_dense.1} parent=0
    _
  %s10 = ssub.s32 1, %s8
  %s11 = scalar_select 0, %s10, %s8
  $region1: #{double_conv_forward_lane_dense.1} parent=0
    #allocation4 [shape = 'u8[16384]{0}', space=vmem, size = 0x4000, scoped, tag = 'input window, operand 0']
    #allocation5 [shape = 's32[2]{0}', space=sflag, size = 0x8, scoped, tag = 'scoped memory for double_conv_forward_lane_dense.1']
    #allocation6 [shape = 's32[2]{0}', space=sflag, size = 0x8, scoped, tag = 'scoped memory for double_conv_forward_lane_dense.1']
    #allocation7 [shape = 'u8[98304]{0}', space=vmem, size = 0x18000, scoped, tag = 'input window, operand 1, single buffered']
    #allocation8 [shape = 's32[1]{0}', space=sflag, size = 0x4, scoped, tag = 'scoped memory for double_conv_forward_lane_dense.1']
    #allocation9 [shape = 'u8[196608]{0}', space=vmem, size = 0x30000, scoped, tag = 'input window, operand 2, single buffered']
    #allocation10 [shape = 'u8[16384]{0}', space=vmem, size = 0x4000, scoped, tag = 'output window, operand 0']
    %12 = vsyncpa [#allocation5], 0
    %s13 = scalar_lea.sflag [#allocation5], 1
    %14 = vsyncpa %s13, 0
    %15 = vsyncpa [#allocation8], 0
    %16 = vsyncpa [#allocation6], 0
    %s17 = scalar_lea.sflag [#allocation6], 1
    %18 = vsyncpa %s17, 0
    loop: start=0, step=1, limit=4
    $region2: #{double_conv_forward_lane_dense.1} parent=1 // loop_pre_header
      _
    $region3: #{double_conv_forward_lane_dense.1} parent=1 // loop_header
      %s20 = sphi 0, %s24
      %p21 = scmp.ge.s32.totalorder %s20, 4
      %s30 = sphi 0, %s32
      %s33 = sphi 0, %s30
      %s34 = sphi 0, %s33
      %s50 = sphi 0, %s34
      %s54 = sphi 0, %s54
      %s56 = sphi 0, %s54
      %s57 = sphi 0, %s56
      %s71 = sphi 0, %s57
      %s75 = sphi 0, %s75
      %s77 = sphi 0, %s75
      %s78 = sphi 0, %s77
      %s92 = sphi 0, %s78
      %s96 = sphi 0, %s96
      %s98 = sphi 0, %s96
      %s99 = sphi 0, %s98
      %s113 = sphi 0, %s99
      %s117 = sphi 0, %s117
      %s119 = sphi 0, %s117
      %s120 = sphi 0, %s119
      %s134 = sphi 0, %s120
      %s138 = sphi 0, %s138
      %s140 = sphi 0, %s138
      %s141 = sphi 0, %s140
      %s155 = sphi 0, %s141
      %s159 = sphi 0, %s159
      %s161 = sphi 0, %s159
      %s162 = sphi 0, %s161
      %s176 = sphi 0, %s162
      %s182 = sphi 0, %s184
      %s185 = sphi 0, %s182
      %s186 = sphi 0, %s185
      %s202 = sphi 0, %s186
    $region4: #{double_conv_forward_lane_dense.1} parent=1 // loop_header_branch
      %23 = sbr.rel (%p21) target = $region8
    $region5: #{double_conv_forward_lane_dense.1} parent=1 // loop_body
      %s25 = ssub.s32 %s20, 1
      %s26 = ssub.s32 %s20, 2
      %s27 = sadd.s32 %s20, 1
      %s28 = ssub.s32 %s20, %s27
      %p29 = scmp.eq.s32.totalorder %s28, 0
      %s31 = sadd.s32 %s30, 1
      %s32 = scalar_select %p29, %s30, %s31
      %p35 = pneg %p29
      %p36 = scmp.eq.s32.totalorder %s20, 1
      %p37 = por %p35, %p36
      %p38 = scmp.ne.s32.totalorder %s30, %s33
      %p39 = scmp.eq.s32.totalorder %s20, 0
      %p40 = por %p38, %p39
      %p41 = scmp.ne.s32.totalorder %s30, %s33
      %p42 = scmp.eq.s32.totalorder %s25, 1
      %p43 = por %p41, %p42
      %p44 = scmp.ne.s32.totalorder %s33, %s34
      %p45 = scmp.eq.s32.totalorder %s25, 0
      %p46 = por %p44, %p45
      %p47 = scmp.ne.s32.totalorder %s33, %s34
      %p48 = scmp.eq.s32.totalorder %s26, 1
      %p49 = por %p47, %p48
      %p51 = scmp.ne.s32.totalorder %s34, %s50
      %p52 = scmp.eq.s32.totalorder %s26, 0
      %p53 = por %p51, %p52
      %s55 = sadd.s32 %s54, 1
      %p58 = scmp.eq.s32.totalorder %s20, 1
      %p59 = scmp.ne.s32.totalorder %s54, %s56
      %p60 = scmp.eq.s32.totalorder %s20, 0
      %p61 = por %p59, %p60
      %p62 = scmp.ne.s32.totalorder %s54, %s56
      %p63 = scmp.eq.s32.totalorder %s25, 1
      %p64 = por %p62, %p63
      %p65 = scmp.ne.s32.totalorder %s56, %s57
      %p66 = scmp.eq.s32.totalorder %s25, 0
      %p67 = por %p65, %p66
      %p68 = scmp.ne.s32.totalorder %s56, %s57
      %p69 = scmp.eq.s32.totalorder %s26, 1
      %p70 = por %p68, %p69
      %p72 = scmp.ne.s32.totalorder %s57, %s71
      %p73 = scmp.eq.s32.totalorder %s26, 0
      %p74 = por %p72, %p73
      %s76 = sadd.s32 %s75, 1
      %p79 = scmp.eq.s32.totalorder %s20, 1
      %p80 = scmp.ne.s32.totalorder %s75, %s77
      %p81 = scmp.eq.s32.totalorder %s20, 0
      %p82 = por %p80, %p81
      %p83 = scmp.ne.s32.totalorder %s75, %s77
      %p84 = scmp.eq.s32.totalorder %s25, 1
      %p85 = por %p83, %p84
      %p86 = scmp.ne.s32.totalorder %s77, %s78
      %p87 = scmp.eq.s32.totalorder %s25, 0
      %p88 = por %p86, %p87
      %p89 = scmp.ne.s32.totalorder %s77, %s78
      %p90 = scmp.eq.s32.totalorder %s26, 1
      %p91 = por %p89, %p90
      %p93 = scmp.ne.s32.totalorder %s78, %s92
      %p94 = scmp.eq.s32.totalorder %s26, 0
      %p95 = por %p93, %p94
      %s97 = sadd.s32 %s96, 1
      %p100 = scmp.eq.s32.totalorder %s20, 1
      %p101 = scmp.ne.s32.totalorder %s96, %s98
      %p102 = scmp.eq.s32.totalorder %s20, 0
      %p103 = por %p101, %p102
      %p104 = scmp.ne.s32.totalorder %s96, %s98
      %p105 = scmp.eq.s32.totalorder %s25, 1
      %p106 = por %p104, %p105
      %p107 = scmp.ne.s32.totalorder %s98, %s99
      %p108 = scmp.eq.s32.totalorder %s25, 0
      %p109 = por %p107, %p108
      %p110 = scmp.ne.s32.totalorder %s98, %s99
      %p111 = scmp.eq.s32.totalorder %s26, 1
      %p112 = por %p110, %p111
      %p114 = scmp.ne.s32.totalorder %s99, %s113
      %p115 = scmp.eq.s32.totalorder %s26, 0
      %p116 = por %p114, %p115
      %s118 = sadd.s32 %s117, 1
      %p121 = scmp.eq.s32.totalorder %s20, 1
      %p122 = scmp.ne.s32.totalorder %s117, %s119
      %p123 = scmp.eq.s32.totalorder %s20, 0
      %p124 = por %p122, %p123
      %p125 = scmp.ne.s32.totalorder %s117, %s119
      %p126 = scmp.eq.s32.totalorder %s25, 1
      %p127 = por %p125, %p126
      %p128 = scmp.ne.s32.totalorder %s119, %s120
      %p129 = scmp.eq.s32.totalorder %s25, 0
      %p130 = por %p128, %p129
      %p131 = scmp.ne.s32.totalorder %s119, %s120
      %p132 = scmp.eq.s32.totalorder %s26, 1
      %p133 = por %p131, %p132
      %p135 = scmp.ne.s32.totalorder %s120, %s134
      %p136 = scmp.eq.s32.totalorder %s26, 0
      %p137 = por %p135, %p136
      %s139 = sadd.s32 %s138, 1
      %p142 = scmp.eq.s32.totalorder %s20, 1
      %p143 = scmp.ne.s32.totalorder %s138, %s140
      %p144 = scmp.eq.s32.totalorder %s20, 0
      %p145 = por %p143, %p144
      %p146 = scmp.ne.s32.totalorder %s138, %s140
      %p147 = scmp.eq.s32.totalorder %s25, 1
      %p148 = por %p146, %p147
      %p149 = scmp.ne.s32.totalorder %s140, %s141
      %p150 = scmp.eq.s32.totalorder %s25, 0
      %p151 = por %p149, %p150
      %p152 = scmp.ne.s32.totalorder %s140, %s141
      %p153 = scmp.eq.s32.totalorder %s26, 1
      %p154 = por %p152, %p153
      %p156 = scmp.ne.s32.totalorder %s141, %s155
      %p157 = scmp.eq.s32.totalorder %s26, 0
      %p158 = por %p156, %p157
      %s160 = sadd.s32 %s159, 1
      %p163 = scmp.eq.s32.totalorder %s20, 1
      %p164 = scmp.ne.s32.totalorder %s159, %s161
      %p165 = scmp.eq.s32.totalorder %s20, 0
      %p166 = por %p164, %p165
      %p167 = scmp.ne.s32.totalorder %s159, %s161
      %p168 = scmp.eq.s32.totalorder %s25, 1
      %p169 = por %p167, %p168
      %p170 = scmp.ne.s32.totalorder %s161, %s162
      %p171 = scmp.eq.s32.totalorder %s25, 0
      %p172 = por %p170, %p171
      %p173 = scmp.ne.s32.totalorder %s161, %s162
      %p174 = scmp.eq.s32.totalorder %s26, 1
      %p175 = por %p173, %p174
      %p177 = scmp.ne.s32.totalorder %s162, %s176
      %p178 = scmp.eq.s32.totalorder %s26, 0
      %p179 = por %p177, %p178
      %s180 = ssub.s32 %s20, %s27
      %p181 = scmp.eq.s32.totalorder %s180, 0
      %s183 = sadd.s32 %s182, 1
      %s184 = scalar_select %p181, %s182, %s183
      %p187 = pneg %p181
      %p188 = scmp.eq.s32.totalorder %s20, 1
      %p189 = por %p187, %p188
      %p190 = scmp.ne.s32.totalorder %s182, %s185
      %p191 = scmp.eq.s32.totalorder %s20, 0
      %p192 = por %p190, %p191
      %p193 = scmp.ne.s32.totalorder %s182, %s185
      %p194 = scmp.eq.s32.totalorder %s25, 1
      %p195 = por %p193, %p194
      %p196 = scmp.ne.s32.totalorder %s185, %s186
      %p197 = scmp.eq.s32.totalorder %s25, 0
      %p198 = por %p196, %p197
      %p199 = scmp.ne.s32.totalorder %s185, %s186
      %p200 = scmp.eq.s32.totalorder %s26, 1
      %p201 = por %p199, %p200
      %p203 = scmp.ne.s32.totalorder %s186, %s202
      %p204 = scmp.eq.s32.totalorder %s26, 0
      %p205 = por %p203, %p204
      %p206 = scmp.le.s32.totalorder 1, %s20
      %p207 = scmp.lt.s32.totalorder %s20, 3
      %p208 = pnand %p206, %p207
      %p209 = pneg %p208
      // Predicated region
      $region9: #{double_conv_forward_lane_dense.1} parent=5 // pred_check
        _
      $region10: #{double_conv_forward_lane_dense.1} parent=5 // pred_check_branch
        %211 = sbr.rel (%p208) target = $region12
      $region11: #{double_conv_forward_lane_dense.1} parent=5 // pred_region
        %s212 = ssub.s32 %s20, 1
        // Predicated region
        $region13: #{double_conv_forward_lane_dense.1} parent=11 // pred_check
          %p213 = pneg %p67
        $region14: #{double_conv_forward_lane_dense.1} parent=11 // pred_check_branch
          %215 = sbr.rel (%p213) target = $region16
        $region15: #{double_conv_forward_lane_dense.1} parent=11 // pred_region
          %s217 = ssub.s32 3072, 3072
          %218 = vsyncadd [#allocation8], %s217
          %s219 = sshll.u32 [#allocation7], 4
          %s220 = int_to_ptr.vmem [resolvable:$true] %s219
          %225 = dma.hbm_to_vmem [thread:$0]  %s1, 3072, %s220, [#allocation8], 128, 128, 8
        $region16: #{double_conv_forward_lane_dense.1} parent=11 // pred_fallthru
          _
        // Predicated region
        $region17: #{double_conv_forward_lane_dense.1} parent=11 // pred_check
          %p226 = pneg %p88
        $region18: #{double_conv_forward_lane_dense.1} parent=11 // pred_check_branch
          %228 = sbr.rel (%p226) target = $region20
        $region19: #{double_conv_forward_lane_dense.1} parent=11 // pred_region
          %s230 = ssub.s32 6144, 6144
          %231 = vsyncadd [#allocation8], %s230
          %s232 = sshll.u32 [#allocation9], 4
          %s233 = int_to_ptr.vmem [resolvable:$true] %s232
          %238 = dma.hbm_to_vmem [thread:$0]  %s2, 6144, %s233, [#allocation8], 128, 128, 8
        $region20: #{double_conv_forward_lane_dense.1} parent=11 // pred_fallthru
          _
        // Predicated region
        $region21: #{double_conv_forward_lane_dense.1} parent=11 // pred_check
          %p239 = pneg %p109
        $region22: #{double_conv_forward_lane_dense.1} parent=11 // pred_check_branch
          %241 = sbr.rel (%p239) target = $region24
        $region23: #{double_conv_forward_lane_dense.1} parent=11 // pred_region
          _
        $region24: #{double_conv_forward_lane_dense.1} parent=11 // pred_fallthru
          _
        // Predicated region
        $region25: #{double_conv_forward_lane_dense.1} parent=11 // pred_check
          %p242 = pneg %p130
        $region26: #{double_conv_forward_lane_dense.1} parent=11 // pred_check_branch
          %244 = sbr.rel (%p242) target = $region28
        $region27: #{double_conv_forward_lane_dense.1} parent=11 // pred_region
          _
        $region28: #{double_conv_forward_lane_dense.1} parent=11 // pred_fallthru
          _
        // Predicated region
        $region29: #{double_conv_forward_lane_dense.1} parent=11 // pred_check
          %p245 = pneg %p151
        $region30: #{double_conv_forward_lane_dense.1} parent=11 // pred_check_branch
          %247 = sbr.rel (%p245) target = $region32
        $region31: #{double_conv_forward_lane_dense.1} parent=11 // pred_region
          _
        $region32: #{double_conv_forward_lane_dense.1} parent=11 // pred_fallthru
          _
        // Predicated region
        $region33: #{double_conv_forward_lane_dense.1} parent=11 // pred_check
          %p248 = pneg %p172
        $region34: #{double_conv_forward_lane_dense.1} parent=11 // pred_check_branch
          %250 = sbr.rel (%p248) target = $region36
        $region35: #{double_conv_forward_lane_dense.1} parent=11 // pred_region
          _
        $region36: #{double_conv_forward_lane_dense.1} parent=11 // pred_fallthru
          _
      $region12: #{double_conv_forward_lane_dense.1} parent=5 // pred_fallthru
        _
      %p251 = scmp.lt.s32.totalorder %s20, 2
      // Predicated region
      $region37: #{double_conv_forward_lane_dense.1} parent=5 // pred_check
        %p252 = pneg %p251
      $region38: #{double_conv_forward_lane_dense.1} parent=5 // pred_check_branch
        %254 = sbr.rel (%p252) target = $region40
      $region39: #{double_conv_forward_lane_dense.1} parent=5 // pred_region
        // Predicated region
        $region41: #{double_conv_forward_lane_dense.1} parent=39 // pred_check
          %p255 = pneg %p40
        $region42: #{double_conv_forward_lane_dense.1} parent=39 // pred_check_branch
          %257 = sbr.rel (%p255) target = $region44
        $region43: #{double_conv_forward_lane_dense.1} parent=39 // pred_region
          %s258 = sand.u32 %s30, 1
          %s259 = scalar_lea.sflag [#allocation5], %s258
          %s260 = sand.u32 %s30, 1
          %s261 = smul.addr %s260, 16
          %s262 = scalar_lea.vmem [#allocation4], %s261
          %s264 = ssub.s32 256, 256
          %265 = vsyncadd %s259, %s264
          %s266 = smul.addr %s20, 2
          %s267 = smul.addr %s266, 128
          %s268 = scalar_lea.hbm %s0, %s267
          %s269 = sshll.u32 %s262, 4
          %s270 = int_to_ptr.vmem [resolvable:$true] %s269
          %275 = dma.hbm_to_vmem [thread:$0]  %s268, 256, %s270, %s259, 128, 128, 8
        $region44: #{double_conv_forward_lane_dense.1} parent=39 // pred_fallthru
          _
      $region40: #{double_conv_forward_lane_dense.1} parent=5 // pred_fallthru
        _
      %p276 = scmp.le.s32.totalorder 1, %s20
      %p277 = scmp.lt.s32.totalorder %s20, 3
      %p278 = pnand %p276, %p277
      %p279 = pneg %p278
      // Predicated region
      $region45: #{double_conv_forward_lane_dense.1} parent=5 // pred_check
        _
      $region46: #{double_conv_forward_lane_dense.1} parent=5 // pred_check_branch
        %281 = sbr.rel (%p278) target = $region48
      $region47: #{double_conv_forward_lane_dense.1} parent=5 // pred_region
        %s282 = ssub.s32 %s20, 1
        %s283 = sand.u32 %s33, 1
        %s284 = scalar_lea.sflag [#allocation5], %s283
        %s285 = sand.u32 %s33, 1
        %s286 = smul.addr %s285, 16
        %s287 = scalar_lea.vmem [#allocation4], %s286
        // Predicated region
        $region49: #{double_conv_forward_lane_dense.1} parent=47 // pred_check
          %p288 = pneg %p46
        $region50: #{double_conv_forward_lane_dense.1} parent=47 // pred_check_branch
          %290 = sbr.rel (%p288) target = $region52
        $region51: #{double_conv_forward_lane_dense.1} parent=47 // pred_region
          %291 = dma.done %s284, 256
        $region52: #{double_conv_forward_lane_dense.1} parent=47 // pred_fallthru
          _
        // Predicated region
        $region53: #{double_conv_forward_lane_dense.1} parent=47 // pred_check
          %p292 = pneg %p67
        $region54: #{double_conv_forward_lane_dense.1} parent=47 // pred_check_branch
          %294 = sbr.rel (%p292) target = $region56
        $region55: #{double_conv_forward_lane_dense.1} parent=47 // pred_region
          %295 = dma.done [#allocation8], 3072
        $region56: #{double_conv_forward_lane_dense.1} parent=47 // pred_fallthru
          _
        // Predicated region
        $region57: #{double_conv_forward_lane_dense.1} parent=47 // pred_check
          %p296 = pneg %p88
        $region58: #{double_conv_forward_lane_dense.1} parent=47 // pred_check_branch
          %298 = sbr.rel (%p296) target = $region60
        $region59: #{double_conv_forward_lane_dense.1} parent=47 // pred_region
          %299 = dma.done [#allocation8], 6144
        $region60: #{double_conv_forward_lane_dense.1} parent=47 // pred_fallthru
          _
        %s300 = sand.u32 %s33, 1
        %s301 = scalar_lea.sflag [#allocation5], %s300
        %s302 = sand.u32 %s33, 1
        %s303 = smul.addr %s302, 16
        %s304 = scalar_lea.vmem [#allocation4], %s303
        %p305 = pneg %p46
        %p306 = pneg %p43
        %p307 = pneg %p67
        %p308 = pneg %p64
        %p309 = pneg %p88
        %p310 = pneg %p85
        %p311 = pneg %p109
        %p312 = pneg %p106
        %p313 = pneg %p130
        %p314 = pneg %p127
        %p315 = pneg %p151
        %p316 = pneg %p148
        %p317 = pneg %p172
        %p318 = pneg %p169
        %p319 = pneg %p198
        %p320 = pneg %p195
        %s321 = sand.u32 %s185, 1
        %s322 = scalar_lea.sflag [#allocation6], %s321
        %s323 = sand.u32 %s185, 1
        %s324 = smul.addr %s323, 16
        %s325 = scalar_lea.vmem [#allocation10], %s324
        %vm326 = vcmask 516096
        %327 = vst.msk [vmem:[#allocation2] sm:$0x1] %vm326, 0.0
        %328 = vst.msk [vmem:[#allocation2 + $0x11] sm:$0x1] %vm326, 0.0
        %329 = vst [vmem:[#allocation3] sm:$0x1] 0.0
        %330 = vst [vmem:[#allocation3 + $0x11] sm:$0x1] 0.0
        %v331 = vld [vmem:[%s287] sm:$0xff]
        %v332 = vld [vmem:[%s287 + $0x8] sm:$0xff]
        %vm333 = vcmask 523264
        %334 = vst.msk [vmem:[#allocation2 + $0x1] sm:$0xff] %vm333, %v331
        %335 = vst.msk [vmem:[#allocation2 + $0x9] sm:$0xff] %vm333, %v332
        %v336 = vld [vmem:[#allocation2] sm:$0xff]
        %v337 = vld [vmem:[#allocation2 + $0x8] sm:$0xff]
        %v338 = vld [vmem:[#allocation7] sm:$0xff]
        %v339 = vld [vmem:[#allocation7 + $0x8] sm:$0xff]
        %v340 = vld [vmem:[#allocation7 + $0x10] sm:$0xff]
        %v341 = vld [vmem:[#allocation7 + $0x18] sm:$0xff]
        %v342 = vld [vmem:[#allocation7 + $0x20] sm:$0xff]
        %v343 = vld [vmem:[#allocation7 + $0x28] sm:$0xff]
        %v344 = vld [vmem:[#allocation7 + $0x30] sm:$0xff]
        %v345 = vld [vmem:[#allocation7 + $0x38] sm:$0xff]
        %v346 = vld [vmem:[#allocation2 + $0x1] sm:$0xff]
        %v347 = vld [vmem:[#allocation2 + $0x9] sm:$0xff]
        %s348 = scalar_lea.vmem [#allocation7], 64
        %v349 = vld [vmem:[%s348] sm:$0xff]
        %v350 = vld [vmem:[%s348 + $0x8] sm:$0xff]
        %v351 = vld [vmem:[%s348 + $0x10] sm:$0xff]
        %v352 = vld [vmem:[%s348 + $0x18] sm:$0xff]
        %v353 = vld [vmem:[%s348 + $0x20] sm:$0xff]
        %v354 = vld [vmem:[%s348 + $0x28] sm:$0xff]
        %v355 = vld [vmem:[%s348 + $0x30] sm:$0xff]
        %v356 = vld [vmem:[%s348 + $0x38] sm:$0xff]
        %v358 = vsel %vm333, %v346, 0
        %v361 = vsel %vm333, %v347, 0
        %363 = vmatprep.subr.mxu0 0.0
        %364 = vmatpush1.msra.mxu0 %v349
        %365 = vmatprep.subr.mxu0 0.0
        %366 = vmatpush1.msra.mxu0 %v350
        %367 = vmatprep.subr.mxu0 0.0
        %368 = vmatpush1.msra.mxu0 %v351
        %369 = vmatprep.subr.mxu0 0.0
        %370 = vmatpush1.msra.mxu0 %v352
        %371 = vmatprep.subr.mxu0 0.0
        %372 = vmatpush1.msra.mxu0 %v353
        %373 = vmatprep.subr.mxu0 0.0
        %374 = vmatpush1.msra.mxu0 %v354
        %375 = vmatprep.subr.mxu0 0.0
        %376 = vmatpush1.msra.mxu0 %v355
        %377 = vmatprep.subr.mxu0 0.0
        %378 = vmatpush1.msra.mxu0 %v356
        %379 = vmatprep.subr.mxu0 0.0
        %380 = vmatpush1.msra.mxu0 0.0
        %381 = vmatprep.subr.mxu0 0.0
        %382 = vmatpush1.msra.mxu0 0.0
        %383 = vmatprep.subr.mxu0 0.0
        %384 = vmatpush1.msra.mxu0 0.0
        %385 = vmatprep.subr.mxu0 0.0
        %386 = vmatpush1.msra.mxu0 0.0
        %387 = vmatprep.subr.mxu0 0.0
        %388 = vmatpush1.msra.mxu0 0.0
        %389 = vmatprep.subr.mxu0 0.0
        %390 = vmatpush1.msra.mxu0 0.0
        %391 = vmatprep.subr.mxu0 0.0
        %392 = vmatpush1.msra.mxu0 0.0
        %393 = vmatprep.subr.mxu0 0.0
        %394 = vmatpush1.msra.mxu0 0.0
        %395 = vmatprep.subr.mxu0 0.0
        %396 = vmatpush1.msra.mxu0 0.0
        %397 = vmatprep.subr.mxu0 0.0
        %398 = vmatpush1.msra.mxu0 0.0
        %399 = vmatprep.subr.mxu0 0.0
        %400 = vmatpush1.msra.mxu0 0.0
        %401 = vmatprep.subr.mxu0 0.0
        %402 = vmatpush1.msra.mxu0 0.0
        %403 = vmatprep.subr.mxu0 0.0
        %404 = vmatpush1.msra.mxu0 0.0
        %405 = vmatprep.subr.mxu0 0.0
        %406 = vmatpush1.msra.mxu0 0.0
        %407 = vmatprep.subr.mxu0 0.0
        %408 = vmatpush1.msra.mxu0 0.0
        %409 = vmatprep.subr.mxu0 0.0
        %410 = vmatpush1.msra.mxu0 0.0
        %411 = vmatprep.subr.mxu0 0.0
        %412 = vmatpush1.msra.mxu0 0.0
        %413 = vmatprep.subr.mxu0 0.0
        %414 = vmatpush1.msra.mxu0 0.0
        %415 = vmatprep.subr.mxu0 0.0
        %416 = vmatpush1.msra.mxu0 0.0
        %417 = vmatprep.subr.mxu0 0.0
        %418 = vmatpush1.msra.mxu0 0.0
        %419 = vmatprep.subr.mxu0 0.0
        %420 = vmatpush1.msra.mxu0 0.0
        %421 = vmatprep.subr.mxu0 0.0
        %422 = vmatpush1.msra.mxu0 0.0
        %423 = vmatprep.subr.mxu0 0.0
        %424 = vmatpush1.msra.mxu0 0.0
        %425 = vmatprep.subr.mxu0 0.0
        %426 = vmatpush1.msra.mxu0 0.0
        %427 = vmatprep.mubr.f32.mxu0 0.0
        %428 = vmatmul.mubr.f32.gmra.mrb[0].mxu0 %v358
        %v429 = vpop.f32.mrb[0].mxu0
        %v430 = vadd.f32 0.0, %v429
        %v431 = vpop.f32.mrb[0].mxu0
        %432 = vmatprep.mubr.f32.mxu0 0.0
        %433 = vmatmul.mubr.f32.gmra.mrb[0].mxu0 %v361
        %v434 = vpop.f32.mrb[0].mxu0
        %v435 = vadd.f32 0.0, %v434
        %v436 = vpop.f32.mrb[0].mxu0
        %437 = vdwg.mxu0
        %v439 = vsel %vm333, %v336, 0
        %v442 = vsel %vm333, %v337, 0
        %444 = vmatprep.subr.mxu0 0.0
        %445 = vmatpush1.msra.mxu0 %v338
        %446 = vmatprep.subr.mxu0 0.0
        %447 = vmatpush1.msra.mxu0 %v339
        %448 = vmatprep.subr.mxu0 0.0
        %449 = vmatpush1.msra.mxu0 %v340
        %450 = vmatprep.subr.mxu0 0.0
        %451 = vmatpush1.msra.mxu0 %v341
        %452 = vmatprep.subr.mxu0 0.0
        %453 = vmatpush1.msra.mxu0 %v342
        %454 = vmatprep.subr.mxu0 0.0
        %455 = vmatpush1.msra.mxu0 %v343
        %456 = vmatprep.subr.mxu0 0.0
        %457 = vmatpush1.msra.mxu0 %v344
        %458 = vmatprep.subr.mxu0 0.0
        %459 = vmatpush1.msra.mxu0 %v345
        %460 = vmatprep.subr.mxu0 0.0
        %461 = vmatpush1.msra.mxu0 0.0
        %462 = vmatprep.subr.mxu0 0.0
        %463 = vmatpush1.msra.mxu0 0.0
        %464 = vmatprep.subr.mxu0 0.0
        %465 = vmatpush1.msra.mxu0 0.0
        %466 = vmatprep.subr.mxu0 0.0
        %467 = vmatpush1.msra.mxu0 0.0
        %468 = vmatprep.subr.mxu0 0.0
        %469 = vmatpush1.msra.mxu0 0.0
        %470 = vmatprep.subr.mxu0 0.0
        %471 = vmatpush1.msra.mxu0 0.0
        %472 = vmatprep.subr.mxu0 0.0
        %473 = vmatpush1.msra.mxu0 0.0
        %474 = vmatprep.subr.mxu0 0.0
        %475 = vmatpush1.msra.mxu0 0.0
        %476 = vmatprep.subr.mxu0 0.0
        %477 = vmatpush1.msra.mxu0 0.0
        %478 = vmatprep.subr.mxu0 0.0
        %479 = vmatpush1.msra.mxu0 0.0
        %480 = vmatprep.subr.mxu0 0.0
        %481 = vmatpush1.msra.mxu0 0.0
        %482 = vmatprep.subr.mxu0 0.0
        %483 = vmatpush1.msra.mxu0 0.0
        %484 = vmatprep.subr.mxu0 0.0
        %485 = vmatpush1.msra.mxu0 0.0
        %486 = vmatprep.subr.mxu0 0.0
        %487 = vmatpush1.msra.mxu0 0.0
        %488 = vmatprep.subr.mxu0 0.0
        %489 = vmatpush1.msra.mxu0 0.0
        %490 = vmatprep.subr.mxu0 0.0
        %491 = vmatpush1.msra.mxu0 0.0
        %492 = vmatprep.subr.mxu0 0.0
        %493 = vmatpush1.msra.mxu0 0.0
        %494 = vmatprep.subr.mxu0 0.0
        %495 = vmatpush1.msra.mxu0 0.0
        %496 = vmatprep.subr.mxu0 0.0
        %497 = vmatpush1.msra.mxu0 0.0
        %498 = vmatprep.subr.mxu0 0.0
        %499 = vmatpush1.msra.mxu0 0.0
        %500 = vmatprep.subr.mxu0 0.0
        %501 = vmatpush1.msra.mxu0 0.0
        %502 = vmatprep.subr.mxu0 0.0
        %503 = vmatpush1.msra.mxu0 0.0
        %504 = vmatprep.subr.mxu0 0.0
        %505 = vmatpush1.msra.mxu0 0.0
        %506 = vmatprep.subr.mxu0 0.0
        %507 = vmatpush1.msra.mxu0 0.0
        %508 = vmatprep.mubr.f32.mxu0 0.0
        %509 = vmatmul.mubr.f32.gmra.mrb[0].mxu0 %v439
        %v510 = vpop.f32.mrb[0].mxu0
        %v511 = vadd.f32 %v430, %v510
        %v512 = vpop.f32.mrb[0].mxu0
        %513 = vmatprep.mubr.f32.mxu0 0.0
        %514 = vmatmul.mubr.f32.gmra.mrb[0].mxu0 %v442
        %v515 = vpop.f32.mrb[0].mxu0
        %v516 = vadd.f32 %v435, %v515
        %v517 = vpop.f32.mrb[0].mxu0
        %518 = vdwg.mxu0
        %v519 = vld [vmem:[#allocation2 + $0x2] sm:$0xff]
        %v520 = vld [vmem:[#allocation2 + $0xa] sm:$0xff]
        %s521 = scalar_lea.vmem [#allocation7], 128
        %v522 = vld [vmem:[%s521] sm:$0xff]
        %v523 = vld [vmem:[%s521 + $0x8] sm:$0xff]
        %v524 = vld [vmem:[%s521 + $0x10] sm:$0xff]
        %v525 = vld [vmem:[%s521 + $0x18] sm:$0xff]
        %v526 = vld [vmem:[%s521 + $0x20] sm:$0xff]
        %v527 = vld [vmem:[%s521 + $0x28] sm:$0xff]
        %v528 = vld [vmem:[%s521 + $0x30] sm:$0xff]
        %v529 = vld [vmem:[%s521 + $0x38] sm:$0xff]
        %v531 = vsel %vm333, %v519, 0
        %v534 = vsel %vm333, %v520, 0
        %536 = vmatprep.subr.mxu0 0.0
        %537 = vmatpush1.msra.mxu0 %v522
        %538 = vmatprep.subr.mxu0 0.0
        %539 = vmatpush1.msra.mxu0 %v523
        %540 = vmatprep.subr.mxu0 0.0
        %541 = vmatpush1.msra.mxu0 %v524
        %542 = vmatprep.subr.mxu0 0.0
        %543 = vmatpush1.msra.mxu0 %v525
        %544 = vmatprep.subr.mxu0 0.0
        %545 = vmatpush1.msra.mxu0 %v526
        %546 = vmatprep.subr.mxu0 0.0
        %547 = vmatpush1.msra.mxu0 %v527
        %548 = vmatprep.subr.mxu0 0.0
        %549 = vmatpush1.msra.mxu0 %v528
        %550 = vmatprep.subr.mxu0 0.0
        %551 = vmatpush1.msra.mxu0 %v529
        %552 = vmatprep.subr.mxu0 0.0
        %553 = vmatpush1.msra.mxu0 0.0
        %554 = vmatprep.subr.mxu0 0.0
        %555 = vmatpush1.msra.mxu0 0.0
        %556 = vmatprep.subr.mxu0 0.0
        %557 = vmatpush1.msra.mxu0 0.0
        %558 = vmatprep.subr.mxu0 0.0
        %559 = vmatpush1.msra.mxu0 0.0
        %560 = vmatprep.subr.mxu0 0.0
        %561 = vmatpush1.msra.mxu0 0.0
        %562 = vmatprep.subr.mxu0 0.0
        %563 = vmatpush1.msra.mxu0 0.0
        %564 = vmatprep.subr.mxu0 0.0
        %565 = vmatpush1.msra.mxu0 0.0
        %566 = vmatprep.subr.mxu0 0.0
        %567 = vmatpush1.msra.mxu0 0.0
        %568 = vmatprep.subr.mxu0 0.0
        %569 = vmatpush1.msra.mxu0 0.0
        %570 = vmatprep.subr.mxu0 0.0
        %571 = vmatpush1.msra.mxu0 0.0
        %572 = vmatprep.subr.mxu0 0.0
        %573 = vmatpush1.msra.mxu0 0.0
        %574 = vmatprep.subr.mxu0 0.0
        %575 = vmatpush1.msra.mxu0 0.0
        %576 = vmatprep.subr.mxu0 0.0
        %577 = vmatpush1.msra.mxu0 0.0
        %578 = vmatprep.subr.mxu0 0.0
        %579 = vmatpush1.msra.mxu0 0.0
        %580 = vmatprep.subr.mxu0 0.0
        %581 = vmatpush1.msra.mxu0 0.0
        %582 = vmatprep.subr.mxu0 0.0
        %583 = vmatpush1.msra.mxu0 0.0
        %584 = vmatprep.subr.mxu0 0.0
        %585 = vmatpush1.msra.mxu0 0.0
        %586 = vmatprep.subr.mxu0 0.0
        %587 = vmatpush1.msra.mxu0 0.0
        %588 = vmatprep.subr.mxu0 0.0
        %589 = vmatpush1.msra.mxu0 0.0
        %590 = vmatprep.subr.mxu0 0.0
        %591 = vmatpush1.msra.mxu0 0.0
        %592 = vmatprep.subr.mxu0 0.0
        %593 = vmatpush1.msra.mxu0 0.0
        %594 = vmatprep.subr.mxu0 0.0
        %595 = vmatpush1.msra.mxu0 0.0
        %596 = vmatprep.subr.mxu0 0.0
        %597 = vmatpush1.msra.mxu0 0.0
        %598 = vmatprep.subr.mxu0 0.0
        %599 = vmatpush1.msra.mxu0 0.0
        %600 = vmatprep.mubr.f32.mxu0 0.0
        %601 = vmatmul.mubr.f32.gmra.mrb[0].mxu0 %v531
        %v602 = vpop.f32.mrb[0].mxu0
        %v603 = vadd.f32 0.0, %v602
        %v604 = vpop.f32.mrb[0].mxu0
        %605 = vmatprep.mubr.f32.mxu0 0.0
        %606 = vmatmul.mubr.f32.gmra.mrb[0].mxu0 %v534
        %v607 = vpop.f32.mrb[0].mxu0
        %v608 = vadd.f32 0.0, %v607
        %v609 = vpop.f32.mrb[0].mxu0
        %610 = vdwg.mxu0
        %v611 = vadd.f32 %v511, %v603
        %v612 = vadd.f32 %v516, %v608
        %v613 = vld [vmem:[%s3] sm:$0x1]
        %v615 = vlaneseq
        %v616 = vshrl.u32 %v615, 7
        %v617 = vsub.s32 0, %v616
        %v618 = vrot.slane %v613, %v617
        %v620 = vmul.f32 %v611, %v618
        %v621 = vmul.f32 %v612, %v618
        %v622 = vld [vmem:[%s4] sm:$0x1]
        %v624 = vlaneseq
        %v625 = vshrl.u32 %v624, 7
        %v626 = vsub.s32 0, %v625
        %v627 = vrot.slane %v622, %v626
        %v629 = vadd.f32 %v620, %v627
        %v630 = vadd.f32 %v621, %v627
        %v631 = vmax.f32 %v629, 0.0
        %v632 = vmax.f32 %v630, 0.0
        %633 = vst [vmem:[#allocation3 + $0x1] sm:$0xff] %v631
        %634 = vst [vmem:[#allocation3 + $0x9] sm:$0xff] %v632
        %v635 = vld [vmem:[#allocation3] sm:$0xff]
        %v636 = vld [vmem:[#allocation3 + $0x8] sm:$0xff]
        %v637 = vld [vmem:[#allocation9] sm:$0xff]
        %v638 = vld [vmem:[#allocation9 + $0x8] sm:$0xff]
        %v639 = vld [vmem:[#allocation9 + $0x10] sm:$0xff]
        %v640 = vld [vmem:[#allocation9 + $0x18] sm:$0xff]
        %v641 = vld [vmem:[#allocation9 + $0x20] sm:$0xff]
        %v642 = vld [vmem:[#allocation9 + $0x28] sm:$0xff]
        %v643 = vld [vmem:[#allocation9 + $0x30] sm:$0xff]
        %v644 = vld [vmem:[#allocation9 + $0x38] sm:$0xff]
        %v645 = vld [vmem:[#allocation9 + $0x40] sm:$0xff]
        %v646 = vld [vmem:[#allocation9 + $0x48] sm:$0xff]
        %v647 = vld [vmem:[#allocation9 + $0x50] sm:$0xff]
        %v648 = vld [vmem:[#allocation9 + $0x58] sm:$0xff]
        %v649 = vld [vmem:[#allocation9 + $0x60] sm:$0xff]
        %v650 = vld [vmem:[#allocation9 + $0x68] sm:$0xff]
        %v651 = vld [vmem:[#allocation9 + $0x70] sm:$0xff]
        %v652 = vld [vmem:[#allocation9 + $0x78] sm:$0xff]
        %v653 = vld [vmem:[#allocation3 + $0x1] sm:$0xff]
        %v654 = vld [vmem:[#allocation3 + $0x9] sm:$0xff]
        %s655 = scalar_lea.vmem [#allocation9], 128
        %v656 = vld [vmem:[%s655] sm:$0xff]
        %v657 = vld [vmem:[%s655 + $0x8] sm:$0xff]
        %v658 = vld [vmem:[%s655 + $0x10] sm:$0xff]
        %v659 = vld [vmem:[%s655 + $0x18] sm:$0xff]
        %v660 = vld [vmem:[%s655 + $0x20] sm:$0xff]
        %v661 = vld [vmem:[%s655 + $0x28] sm:$0xff]
        %v662 = vld [vmem:[%s655 + $0x30] sm:$0xff]
        %v663 = vld [vmem:[%s655 + $0x38] sm:$0xff]
        %v664 = vld [vmem:[%s655 + $0x40] sm:$0xff]
        %v665 = vld [vmem:[%s655 + $0x48] sm:$0xff]
        %v666 = vld [vmem:[%s655 + $0x50] sm:$0xff]
        %v667 = vld [vmem:[%s655 + $0x58] sm:$0xff]
        %v668 = vld [vmem:[%s655 + $0x60] sm:$0xff]
        %v669 = vld [vmem:[%s655 + $0x68] sm:$0xff]
        %v670 = vld [vmem:[%s655 + $0x70] sm:$0xff]
        %v671 = vld [vmem:[%s655 + $0x78] sm:$0xff]
        %672 = vmatprep.subr.mxu0 0.0
        %673 = vmatpush1.msra.mxu0 %v656
        %674 = vmatprep.subr.mxu0 0.0
        %675 = vmatpush1.msra.mxu0 %v657
        %676 = vmatprep.subr.mxu0 0.0
        %677 = vmatpush1.msra.mxu0 %v658
        %678 = vmatprep.subr.mxu0 0.0
        %679 = vmatpush1.msra.mxu0 %v659
        %680 = vmatprep.subr.mxu0 0.0
        %681 = vmatpush1.msra.mxu0 %v660
        %682 = vmatprep.subr.mxu0 0.0
        %683 = vmatpush1.msra.mxu0 %v661
        %684 = vmatprep.subr.mxu0 0.0
        %685 = vmatpush1.msra.mxu0 %v662
        %686 = vmatprep.subr.mxu0 0.0
        %687 = vmatpush1.msra.mxu0 %v663
        %688 = vmatprep.subr.mxu0 0.0
        %689 = vmatpush1.msra.mxu0 %v664
        %690 = vmatprep.subr.mxu0 0.0
        %691 = vmatpush1.msra.mxu0 %v665
        %692 = vmatprep.subr.mxu0 0.0
        %693 = vmatpush1.msra.mxu0 %v666
        %694 = vmatprep.subr.mxu0 0.0
        %695 = vmatpush1.msra.mxu0 %v667
        %696 = vmatprep.subr.mxu0 0.0
        %697 = vmatpush1.msra.mxu0 %v668
        %698 = vmatprep.subr.mxu0 0.0
        %699 = vmatpush1.msra.mxu0 %v669
        %700 = vmatprep.subr.mxu0 0.0
        %701 = vmatpush1.msra.mxu0 %v670
        %702 = vmatprep.subr.mxu0 0.0
        %703 = vmatpush1.msra.mxu0 %v671
        %704 = vmatprep.subr.mxu0 0.0
        %705 = vmatpush1.msra.mxu0 0.0
        %706 = vmatprep.subr.mxu0 0.0
        %707 = vmatpush1.msra.mxu0 0.0
        %708 = vmatprep.subr.mxu0 0.0
        %709 = vmatpush1.msra.mxu0 0.0
        %710 = vmatprep.subr.mxu0 0.0
        %711 = vmatpush1.msra.mxu0 0.0
        %712 = vmatprep.subr.mxu0 0.0
        %713 = vmatpush1.msra.mxu0 0.0
        %714 = vmatprep.subr.mxu0 0.0
        %715 = vmatpush1.msra.mxu0 0.0
        %716 = vmatprep.subr.mxu0 0.0
        %717 = vmatpush1.msra.mxu0 0.0
        %718 = vmatprep.subr.mxu0 0.0
        %719 = vmatpush1.msra.mxu0 0.0
        %720 = vmatprep.subr.mxu0 0.0
        %721 = vmatpush1.msra.mxu0 0.0
        %722 = vmatprep.subr.mxu0 0.0
        %723 = vmatpush1.msra.mxu0 0.0
        %724 = vmatprep.subr.mxu0 0.0
        %725 = vmatpush1.msra.mxu0 0.0
        %726 = vmatprep.subr.mxu0 0.0
        %727 = vmatpush1.msra.mxu0 0.0
        %728 = vmatprep.subr.mxu0 0.0
        %729 = vmatpush1.msra.mxu0 0.0
        %730 = vmatprep.subr.mxu0 0.0
        %731 = vmatpush1.msra.mxu0 0.0
        %732 = vmatprep.subr.mxu0 0.0
        %733 = vmatpush1.msra.mxu0 0.0
        %734 = vmatprep.subr.mxu0 0.0
        %735 = vmatpush1.msra.mxu0 0.0
        %736 = vmatprep.mubr.f32.mxu0 0.0
        %737 = vmatmul.mubr.f32.gmra.mrb[0].mxu0 %v653
        %v738 = vpop.f32.mrb[0].mxu0
        %v739 = vadd.f32 0.0, %v738
        %v740 = vpop.f32.mrb[0].mxu0
        %741 = vmatprep.mubr.f32.mxu0 0.0
        %742 = vmatmul.mubr.f32.gmra.mrb[0].mxu0 %v654
        %v743 = vpop.f32.mrb[0].mxu0
        %v744 = vadd.f32 0.0, %v743
        %v745 = vpop.f32.mrb[0].mxu0
        %746 = vdwg.mxu0
        %747 = vmatprep.subr.mxu0 0.0
        %748 = vmatpush1.msra.mxu0 %v637
        %749 = vmatprep.subr.mxu0 0.0
        %750 = vmatpush1.msra.mxu0 %v638
        %751 = vmatprep.subr.mxu0 0.0
        %752 = vmatpush1.msra.mxu0 %v639
        %753 = vmatprep.subr.mxu0 0.0
        %754 = vmatpush1.msra.mxu0 %v640
        %755 = vmatprep.subr.mxu0 0.0
        %756 = vmatpush1.msra.mxu0 %v641
        %757 = vmatprep.subr.mxu0 0.0
        %758 = vmatpush1.msra.mxu0 %v642
        %759 = vmatprep.subr.mxu0 0.0
        %760 = vmatpush1.msra.mxu0 %v643
        %761 = vmatprep.subr.mxu0 0.0
        %762 = vmatpush1.msra.mxu0 %v644
        %763 = vmatprep.subr.mxu0 0.0
        %764 = vmatpush1.msra.mxu0 %v645
        %765 = vmatprep.subr.mxu0 0.0
        %766 = vmatpush1.msra.mxu0 %v646
        %767 = vmatprep.subr.mxu0 0.0
        %768 = vmatpush1.msra.mxu0 %v647
        %769 = vmatprep.subr.mxu0 0.0
        %770 = vmatpush1.msra.mxu0 %v648
        %771 = vmatprep.subr.mxu0 0.0
        %772 = vmatpush1.msra.mxu0 %v649
        %773 = vmatprep.subr.mxu0 0.0
        %774 = vmatpush1.msra.mxu0 %v650
        %775 = vmatprep.subr.mxu0 0.0
        %776 = vmatpush1.msra.mxu0 %v651
        %777 = vmatprep.subr.mxu0 0.0
        %778 = vmatpush1.msra.mxu0 %v652
        %779 = vmatprep.subr.mxu0 0.0
        %780 = vmatpush1.msra.mxu0 0.0
        %781 = vmatprep.subr.mxu0 0.0
        %782 = vmatpush1.msra.mxu0 0.0
        %783 = vmatprep.subr.mxu0 0.0
        %784 = vmatpush1.msra.mxu0 0.0
        %785 = vmatprep.subr.mxu0 0.0
        %786 = vmatpush1.msra.mxu0 0.0
        %787 = vmatprep.subr.mxu0 0.0
        %788 = vmatpush1.msra.mxu0 0.0
        %789 = vmatprep.subr.mxu0 0.0
        %790 = vmatpush1.msra.mxu0 0.0
        %791 = vmatprep.subr.mxu0 0.0
        %792 = vmatpush1.msra.mxu0 0.0
        %793 = vmatprep.subr.mxu0 0.0
        %794 = vmatpush1.msra.mxu0 0.0
        %795 = vmatprep.subr.mxu0 0.0
        %796 = vmatpush1.msra.mxu0 0.0
        %797 = vmatprep.subr.mxu0 0.0
        %798 = vmatpush1.msra.mxu0 0.0
        %799 = vmatprep.subr.mxu0 0.0
        %800 = vmatpush1.msra.mxu0 0.0
        %801 = vmatprep.subr.mxu0 0.0
        %802 = vmatpush1.msra.mxu0 0.0
        %803 = vmatprep.subr.mxu0 0.0
        %804 = vmatpush1.msra.mxu0 0.0
        %805 = vmatprep.subr.mxu0 0.0
        %806 = vmatpush1.msra.mxu0 0.0
        %807 = vmatprep.subr.mxu0 0.0
        %808 = vmatpush1.msra.mxu0 0.0
        %809 = vmatprep.subr.mxu0 0.0
        %810 = vmatpush1.msra.mxu0 0.0
        %811 = vmatprep.mubr.f32.mxu0 0.0
        %812 = vmatmul.mubr.f32.gmra.mrb[0].mxu0 %v635
        %v813 = vpop.f32.mrb[0].mxu0
        %v814 = vadd.f32 %v739, %v813
        %v815 = vpop.f32.mrb[0].mxu0
        %816 = vmatprep.mubr.f32.mxu0 0.0
        %817 = vmatmul.mubr.f32.gmra.mrb[0].mxu0 %v636
        %v818 = vpop.f32.mrb[0].mxu0
        %v819 = vadd.f32 %v744, %v818
        %v820 = vpop.f32.mrb[0].mxu0
        %821 = vdwg.mxu0
        %v822 = vld [vmem:[#allocation3 + $0x2] sm:$0xff]
        %v823 = vld [vmem:[#allocation3 + $0xa] sm:$0xff]
        %s824 = scalar_lea.vmem [#allocation9], 256
        %v825 = vld [vmem:[%s824] sm:$0xff]
        %v826 = vld [vmem:[%s824 + $0x8] sm:$0xff]
        %v827 = vld [vmem:[%s824 + $0x10] sm:$0xff]
        %v828 = vld [vmem:[%s824 + $0x18] sm:$0xff]
        %v829 = vld [vmem:[%s824 + $0x20] sm:$0xff]
        %v830 = vld [vmem:[%s824 + $0x28] sm:$0xff]
        %v831 = vld [vmem:[%s824 + $0x30] sm:$0xff]
        %v832 = vld [vmem:[%s824 + $0x38] sm:$0xff]
        %v833 = vld [vmem:[%s824 + $0x40] sm:$0xff]
        %v834 = vld [vmem:[%s824 + $0x48] sm:$0xff]
        %v835 = vld [vmem:[%s824 + $0x50] sm:$0xff]
        %v836 = vld [vmem:[%s824 + $0x58] sm:$0xff]
        %v837 = vld [vmem:[%s824 + $0x60] sm:$0xff]
        %v838 = vld [vmem:[%s824 + $0x68] sm:$0xff]
        %v839 = vld [vmem:[%s824 + $0x70] sm:$0xff]
        %v840 = vld [vmem:[%s824 + $0x78] sm:$0xff]
        %841 = vmatprep.subr.mxu0 0.0
        %842 = vmatpush1.msra.mxu0 %v825
        %843 = vmatprep.subr.mxu0 0.0
        %844 = vmatpush1.msra.mxu0 %v826
        %845 = vmatprep.subr.mxu0 0.0
        %846 = vmatpush1.msra.mxu0 %v827
        %847 = vmatprep.subr.mxu0 0.0
        %848 = vmatpush1.msra.mxu0 %v828
        %849 = vmatprep.subr.mxu0 0.0
        %850 = vmatpush1.msra.mxu0 %v829
        %851 = vmatprep.subr.mxu0 0.0
        %852 = vmatpush1.msra.mxu0 %v830
        %853 = vmatprep.subr.mxu0 0.0
        %854 = vmatpush1.msra.mxu0 %v831
        %855 = vmatprep.subr.mxu0 0.0
        %856 = vmatpush1.msra.mxu0 %v832
        %857 = vmatprep.subr.mxu0 0.0
        %858 = vmatpush1.msra.mxu0 %v833
        %859 = vmatprep.subr.mxu0 0.0
        %860 = vmatpush1.msra.mxu0 %v834
        %861 = vmatprep.subr.mxu0 0.0
        %862 = vmatpush1.msra.mxu0 %v835
        %863 = vmatprep.subr.mxu0 0.0
        %864 = vmatpush1.msra.mxu0 %v836
        %865 = vmatprep.subr.mxu0 0.0
        %866 = vmatpush1.msra.mxu0 %v837
        %867 = vmatprep.subr.mxu0 0.0
        %868 = vmatpush1.msra.mxu0 %v838
        %869 = vmatprep.subr.mxu0 0.0
        %870 = vmatpush1.msra.mxu0 %v839
        %871 = vmatprep.subr.mxu0 0.0
        %872 = vmatpush1.msra.mxu0 %v840
        %873 = vmatprep.subr.mxu0 0.0
        %874 = vmatpush1.msra.mxu0 0.0
        %875 = vmatprep.subr.mxu0 0.0
        %876 = vmatpush1.msra.mxu0 0.0
        %877 = vmatprep.subr.mxu0 0.0
        %878 = vmatpush1.msra.mxu0 0.0
        %879 = vmatprep.subr.mxu0 0.0
        %880 = vmatpush1.msra.mxu0 0.0
        %881 = vmatprep.subr.mxu0 0.0
        %882 = vmatpush1.msra.mxu0 0.0
        %883 = vmatprep.subr.mxu0 0.0
        %884 = vmatpush1.msra.mxu0 0.0
        %885 = vmatprep.subr.mxu0 0.0
        %886 = vmatpush1.msra.mxu0 0.0
        %887 = vmatprep.subr.mxu0 0.0
        %888 = vmatpush1.msra.mxu0 0.0
        %889 = vmatprep.subr.mxu0 0.0
        %890 = vmatpush1.msra.mxu0 0.0
        %891 = vmatprep.subr.mxu0 0.0
        %892 = vmatpush1.msra.mxu0 0.0
        %893 = vmatprep.subr.mxu0 0.0
        %894 = vmatpush1.msra.mxu0 0.0
        %895 = vmatprep.subr.mxu0 0.0
        %896 = vmatpush1.msra.mxu0 0.0
        %897 = vmatprep.subr.mxu0 0.0
        %898 = vmatpush1.msra.mxu0 0.0
        %899 = vmatprep.subr.mxu0 0.0
        %900 = vmatpush1.msra.mxu0 0.0
        %901 = vmatprep.subr.mxu0 0.0
        %902 = vmatpush1.msra.mxu0 0.0
        %903 = vmatprep.subr.mxu0 0.0
        %904 = vmatpush1.msra.mxu0 0.0
        %905 = vmatprep.mubr.f32.mxu0 0.0
        %906 = vmatmul.mubr.f32.gmra.mrb[0].mxu0 %v822
        %v907 = vpop.f32.mrb[0].mxu0
        %v908 = vadd.f32 0.0, %v907
        %v909 = vpop.f32.mrb[0].mxu0
        %910 = vmatprep.mubr.f32.mxu0 0.0
        %911 = vmatmul.mubr.f32.gmra.mrb[0].mxu0 %v823
        %v912 = vpop.f32.mrb[0].mxu0
        %v913 = vadd.f32 0.0, %v912
        %v914 = vpop.f32.mrb[0].mxu0
        %915 = vdwg.mxu0
        %v916 = vadd.f32 %v814, %v908
        %v917 = vadd.f32 %v819, %v913
        %v918 = vld [vmem:[%s5] sm:$0x1]
        %v920 = vlaneseq
        %v921 = vshrl.u32 %v920, 7
        %v922 = vsub.s32 0, %v921
        %v923 = vrot.slane %v918, %v922
        %v925 = vmul.f32 %v916, %v923
        %v926 = vmul.f32 %v917, %v923
        %v927 = vld [vmem:[%s6] sm:$0x1]
        %v929 = vlaneseq
        %v930 = vshrl.u32 %v929, 7
        %v931 = vsub.s32 0, %v930
        %v932 = vrot.slane %v927, %v931
        %v934 = vadd.f32 %v925, %v932
        %v935 = vadd.f32 %v926, %v932
        %v936 = vmax.f32 %v934, 0.0
        %v937 = vmax.f32 %v935, 0.0
        %938 = vst [vmem:[%s325] sm:$0xff] %v936
        %939 = vst [vmem:[%s325 + $0x8] sm:$0xff] %v937
        %s940 = sand.u32 %s185, 1
        %s941 = scalar_lea.sflag [#allocation6], %s940
        %s942 = sand.u32 %s185, 1
        %s943 = smul.addr %s942, 16
        %s944 = scalar_lea.vmem [#allocation10], %s943
        // Predicated region
        $region61: #{double_conv_forward_lane_dense.1} parent=47 // pred_check
          %p945 = pneg %p195
        $region62: #{double_conv_forward_lane_dense.1} parent=47 // pred_check_branch
          %947 = sbr.rel (%p945) target = $region64
        $region63: #{double_conv_forward_lane_dense.1} parent=47 // pred_region
          %s949 = ssub.s32 256, 256
          %950 = vsyncadd %s941, %s949
          %s951 = smul.addr %s25, 2
          %s952 = smul.addr %s951, 128
          %s953 = scalar_lea.hbm %s7, %s952
          %s954 = sshll.u32 %s944, 4
          %s955 = int_to_ptr.vmem [resolvable:$true] %s954
          %960 = dma.vmem_to_hbm [thread:$0]  %s955, 256, %s953, %s941, 128, 128, 8
        $region64: #{double_conv_forward_lane_dense.1} parent=47 // pred_fallthru
          _
      $region48: #{double_conv_forward_lane_dense.1} parent=5 // pred_fallthru
        _
      %p961 = scmp.le.s32.totalorder 2, %s20
      // Predicated region
      $region65: #{double_conv_forward_lane_dense.1} parent=5 // pred_check
        %p962 = pneg %p961
      $region66: #{double_conv_forward_lane_dense.1} parent=5 // pred_check_branch
        %964 = sbr.rel (%p962) target = $region68
      $region67: #{double_conv_forward_lane_dense.1} parent=5 // pred_region
        %s965 = ssub.s32 %s20, 2
        // Predicated region
        $region69: #{double_conv_forward_lane_dense.1} parent=67 // pred_check
          %p966 = pneg %p201
        $region70: #{double_conv_forward_lane_dense.1} parent=67 // pred_check_branch
          %968 = sbr.rel (%p966) target = $region72
        $region71: #{double_conv_forward_lane_dense.1} parent=67 // pred_region
          %s969 = sand.u32 %s186, 1
          %s970 = scalar_lea.sflag [#allocation6], %s969
          %s971 = sand.u32 %s186, 1
          %s972 = smul.addr %s971, 16
          %s973 = scalar_lea.vmem [#allocation10], %s972
          %974 = dma.done %s970, 256
        $region72: #{double_conv_forward_lane_dense.1} parent=67 // pred_fallthru
          _
      $region68: #{double_conv_forward_lane_dense.1} parent=5 // pred_fallthru
        _
    $region6: #{double_conv_forward_lane_dense.1} parent=1 // loop_footer
      %s24 = sadd.s32 1, %s20
    $region7: #{double_conv_forward_lane_dense.1} parent=1 // loop_footer_branch
      %19 = sbr.rel target = $region3
    $region8: #{double_conv_forward_lane_dense.1} parent=1 // loop_exit
      _
    %975 = vsyncpa [#allocation5], 1
    %s976 = scalar_lea.sflag [#allocation5], 1
    %977 = vsyncpa %s976, 1
    %978 = vsyncpa [#allocation8], 1
    %979 = vsyncpa [#allocation6], 1
    %s980 = scalar_lea.sflag [#allocation6], 1
    %981 = vsyncpa %s980, 1

</llo_original>
